<compile_context>
chip_gen: v6e
topology: v6e:2x2x1
jax: 0.10.0
libtpu: 0.0.40
codegen_flags: <defaults>
</compile_context>

<pallas_src>
import functools

import jax
import jax.numpy as jnp
from jax import lax
from jax.experimental import pallas as pl
from jax.experimental.pallas import tpu as pltpu

_LANE = 128


def _round_up(x, m):
    return (x + m - 1) // m * m


def _attention_kernel(o_ref, c_ref, w_ref, b_ref, y_ref, attn_ref, *, li):
    # o_ref:    (TB, Lo,  Dp)   decoder output block
    # c_ref:    (TB, Lip, Dp)   encoder context block
    # w_ref:    (2*Dp, Dp)      fused linear weight (acts on [mix, output])
    # b_ref:    (1, Dp)         linear bias
    # y_ref:    (TB, Lo,  Dp)   attended output
    # attn_ref: (TB, Lo,  Lip)  attention weights
    o = o_ref[...]                      # native dtype -> MXU directly
    c = c_ref[...]

    # scores = output @ context^T  (batched over TB, contract over D; no .T)
    s = lax.dot_general(o, c, (((2,), (2,)), ((0,), (0,))),
                        preferred_element_type=jnp.float32)       # (TB, Lo, Lip)

    # Mask the zero-padded encoder positions so they get zero attention weight.
    lip = s.shape[-1]
    if lip != li:
        col = lax.broadcasted_iota(jnp.int32, s.shape, dimension=2)
        s = jnp.where(col < li, s, -jnp.inf)

    # Softmax over the (padded) input_len axis, in f32.
    m = jnp.max(s, axis=-1, keepdims=True)
    p = jnp.exp(s - m)
    denom = jnp.sum(p, axis=-1, keepdims=True)
    attn = p * pl.reciprocal(denom, approx=True)                  # (TB, Lo, Lip)

    # mix = attn @ context   (batched, contract over Lip)
    mix = lax.dot_general(attn.astype(c.dtype), c,
                          (((2,), (1,)), ((0,), (0,))),
                          preferred_element_type=jnp.float32)     # (TB, Lo, Dp)

    # tanh(Linear(cat(mix, output))) as one fused dot with K = 2*Dp on the
    # flattened (TB*Lo, 2*Dp) operand.
    tb, lo, dp = o.shape
    comb = jnp.concatenate([mix.astype(o.dtype), o], axis=-1)     # (TB, Lo, 2*Dp)
    comb = comb.reshape(tb * lo, 2 * dp)
    y = jnp.tanh(
        jnp.dot(comb, w_ref[...], preferred_element_type=jnp.float32)
        + b_ref[...].astype(jnp.float32)
    )                                                             # (TB*Lo, Dp)

    y_ref[...] = y.reshape(tb, lo, dp).astype(y_ref.dtype)
    attn_ref[...] = attn.astype(attn_ref.dtype)


def _pick_block_batch(batch, out_len):
    """Largest divisor of `batch` such that block_batch * out_len ~ 256."""
    target = max(1, 256 // max(out_len, 1))
    tb = 1
    for d in range(1, min(batch, target) + 1):
        if batch % d == 0:
            tb = d
    return tb


def attention_forward(output, context, weight, bias, *, block_batch=None):
    """
    output : (B, Lo, D)  decoder features
    context: (B, Li, D)  encoder features
    weight : (D, 2*D)    nn.Linear(dim*2, dim).weight  (PyTorch layout)
    bias   : (D,)        nn.Linear bias
    returns (attended_output (B, Lo, D), attn (B, Lo, Li))
    """
    B, Lo, D = output.shape
    _, Li, _ = context.shape

    Dp = _round_up(D, _LANE)
    Lip = _round_up(Li, _LANE)
    tb = block_batch if block_batch is not None else _pick_block_batch(B, Lo)
    assert B % tb == 0, "block_batch must divide the batch size"

    # --- lane-dense padding (exact: padded cols are zero / -inf masked) ------
    o_p = jnp.pad(output, ((0, 0), (0, 0), (0, Dp - D)))
    c_p = jnp.pad(context, ((0, 0), (0, Lip - Li), (0, Dp - D)))

    # Fused projection: y = [mix, output] @ W + b with W of shape (2*Dp, Dp).
    w_fused = jnp.zeros((2 * Dp, Dp), dtype=weight.dtype)
    w_fused = w_fused.at[:D, :D].set(weight[:, :D].T)          # acts on mix
    w_fused = w_fused.at[Dp:Dp + D, :D].set(weight[:, D:].T)   # acts on output
    b_p = jnp.zeros((1, Dp), dtype=bias.dtype).at[0, :D].set(bias)

    out_shapes = (
        jax.ShapeDtypeStruct((B, Lo, Dp), output.dtype),
        jax.ShapeDtypeStruct((B, Lo, Lip), output.dtype),
    )

    kernel = functools.partial(_attention_kernel, li=Li)

    y_p, attn_p = pl.pallas_call(
        kernel,
        out_shape=out_shapes,
        grid=(B // tb,),
        in_specs=[
            pl.BlockSpec((tb, Lo, Dp), lambda b: (b, 0, 0)),
            pl.BlockSpec((tb, Lip, Dp), lambda b: (b, 0, 0)),
            pl.BlockSpec((2 * Dp, Dp), lambda b: (0, 0)),
            pl.BlockSpec((1, Dp), lambda b: (0, 0)),
        ],
        out_specs=[
            pl.BlockSpec((tb, Lo, Dp), lambda b: (b, 0, 0)),
            pl.BlockSpec((tb, Lo, Lip), lambda b: (b, 0, 0)),
        ],
        compiler_params=pltpu.CompilerParams(
            dimension_semantics=("parallel",),
            vmem_limit_bytes=32 * 1024 * 1024,
        ),
    )(o_p, c_p, w_fused, b_p)

    # Slice the lane padding back off.
    return y_p[:, :, :D], attn_p[:, :, :Li]


def _reference(output, context, weight, bias):
    """Pure-JAX reference mirroring the PyTorch forward."""
    attn = jnp.einsum("bod,bid->boi", output, context)
    attn = jax.nn.softmax(attn, axis=-1)
    mix = jnp.einsum("boi,bid->bod", attn, context)
    combined = jnp.concatenate([mix, output], axis=-1)           # (B, Lo, 2D)
    y = jnp.tanh(combined @ weight.T + bias)
    return y, attn


if __name__ == "__main__":
    B, Lo, Li, D = 2, 8, 16, 32

    key = jax.random.PRNGKey(0)
    k1, k2, k3, k4 = jax.random.split(key, 4)
    output = jax.random.normal(k1, (B, Lo, D), dtype=jnp.float32)
    context = jax.random.normal(k2, (B, Li, D), dtype=jnp.float32)
    # deterministic "synthetic" nn.Linear(2*D, D) params
    weight = jax.random.normal(k3, (D, 2 * D), dtype=jnp.float32) * 0.1
    bias = jax.random.normal(k4, (D,), dtype=jnp.float32) * 0.1

    y, attn = attention_forward(output, context, weight, bias)
    jax.block_until_ready((y, attn))

    y_ref, attn_ref = _reference(output, context, weight, bias)
    # Tolerance slightly looser than f32 epsilon because the softmax uses the
    # EUP approximate reciprocal (pl.reciprocal(..., approx=True)).
    assert jnp.allclose(y, y_ref, atol=5e-3, rtol=5e-3), \
        float(jnp.max(jnp.abs(y - y_ref)))
    assert jnp.allclose(attn, attn_ref, atol=5e-3, rtol=5e-3), \
        float(jnp.max(jnp.abs(attn - attn_ref)))

    print("KERNEL_OK")
</pallas_src>

<mosaic_0001>
module attributes {stable_mosaic.version = 11 : i64} {
  func.func @_attention_kernel(%arg0: i32, %arg1: memref<2x8x128xf32, #tpu.memory_space<vmem>>, %arg2: memref<2x128x128xf32, #tpu.memory_space<vmem>>, %arg3: memref<256x128xf32, #tpu.memory_space<vmem>>, %arg4: memref<1x128xf32, #tpu.memory_space<vmem>>, %arg5: memref<2x8x128xf32, #tpu.memory_space<vmem>>, %arg6: memref<2x8x128xf32, #tpu.memory_space<vmem>>) attributes {dimension_semantics = [#tpu.dimension_semantics<parallel>], iteration_bounds = array<i64: 1>, scalar_prefetch = 0 : i64, scratch_operands = 0 : i64, tpu.core_type = #tpu.core_type<tc>, window_params = [{transform_indices = @transform_0, window_bounds = array<i64: 2, 8, 128>}, {transform_indices = @transform_1, window_bounds = array<i64: 2, 128, 128>}, {pipeline_mode = #tpu.pipeline_mode<synchronous>, transform_indices = @transform_2, window_bounds = array<i64: 256, 128>}, {pipeline_mode = #tpu.pipeline_mode<synchronous>, transform_indices = @transform_3, window_bounds = array<i64: 1, 128>}, {transform_indices = @transform_4, window_bounds = array<i64: 2, 8, 128>}, {transform_indices = @transform_5, window_bounds = array<i64: 2, 8, 128>}]} {
    %c0 = arith.constant 0 : index
    %c0_0 = arith.constant 0 : index
    %c0_1 = arith.constant 0 : index
    %0 = vector.load %arg1[%c0, %c0_0, %c0_1] : memref<2x8x128xf32, #tpu.memory_space<vmem>>, vector<2x8x128xf32>
    %c0_2 = arith.constant 0 : index
    %c0_3 = arith.constant 0 : index
    %c0_4 = arith.constant 0 : index
    %1 = vector.load %arg2[%c0_2, %c0_3, %c0_4] : memref<2x128x128xf32, #tpu.memory_space<vmem>>, vector<2x128x128xf32>
    %cst = arith.constant dense<0.000000e+00> : vector<2x8x128xf32>
    %2 = tpu.matmul %0, %1, %cst {dimension_numbers = #tpu.dot_dimension_numbers<[2], [2], [1], [1], [0, 0, 0, 1, 1, 1], [0], [0]>} : vector<2x8x128xf32>, vector<2x128x128xf32>, vector<2x8x128xf32> -> vector<2x8x128xf32>
    %3 = tpu.iota {dimensions = array<i32: 2>} : vector<2x8x128xi32>
    %c16_i32 = arith.constant 16 : i32
    %4 = vector.broadcast %c16_i32 : i32 to vector<2x8x128xi32>
    %5 = arith.cmpi slt, %3, %4 : vector<2x8x128xi32>
    %cst_5 = arith.constant 0xFF800000 : f32
    %6 = vector.broadcast %cst_5 : f32 to vector<2x8x128xf32>
    %7 = arith.select %5, %2, %6 : vector<2x8x128xi1>, vector<2x8x128xf32>
    %cst_6 = arith.constant dense<0xFF800000> : vector<2x8xf32>
    %8 = vector.multi_reduction <maximumf>, %7, %cst_6 [2] : vector<2x8x128xf32> to vector<2x8xf32>
    %9 = vector.shape_cast %8 : vector<2x8xf32> to vector<2x8x1xf32>
    %10 = vector.broadcast %9 : vector<2x8x1xf32> to vector<2x8x128xf32>
    %11 = arith.subf %7, %10 : vector<2x8x128xf32>
    %12 = math.exp %11 : vector<2x8x128xf32>
    %cst_7 = arith.constant dense<0.000000e+00> : vector<2x8xf32>
    %13 = vector.multi_reduction <add>, %12, %cst_7 [2] : vector<2x8x128xf32> to vector<2x8xf32>
    %14 = vector.shape_cast %13 : vector<2x8xf32> to vector<2x8x1xf32>
    %15 = tpu.reciprocal %14 {approx = true} : vector<2x8x1xf32> -> vector<2x8x1xf32>
    %16 = vector.broadcast %15 : vector<2x8x1xf32> to vector<2x8x128xf32>
    %17 = arith.mulf %12, %16 : vector<2x8x128xf32>
    %cst_8 = arith.constant dense<0.000000e+00> : vector<2x8x128xf32>
    %18 = tpu.matmul %17, %1, %cst_8 {dimension_numbers = #tpu.dot_dimension_numbers<[2], [1], [1], [2], [0, 0, 0, 1, 1, 2], [0], [0]>} : vector<2x8x128xf32>, vector<2x128x128xf32>, vector<2x8x128xf32> -> vector<2x8x128xf32>
    %19 = tpu.concatenate %18, %0 in 2 : vector<2x8x128xf32>, vector<2x8x128xf32> -> vector<2x8x256xf32>
    %20 = vector.shape_cast %19 : vector<2x8x256xf32> to vector<16x256xf32>
    %c0_9 = arith.constant 0 : index
    %c0_10 = arith.constant 0 : index
    %21 = vector.load %arg3[%c0_9, %c0_10] : memref<256x128xf32, #tpu.memory_space<vmem>>, vector<256x128xf32>
    %cst_11 = arith.constant dense<0.000000e+00> : vector<16x128xf32>
    %22 = tpu.matmul %20, %21, %cst_11 {dimension_numbers = #tpu.dot_dimension_numbers<[1], [0], [0], [1], [0, 0, 1, 1], [], []>} : vector<16x256xf32>, vector<256x128xf32>, vector<16x128xf32> -> vector<16x128xf32>
    %c0_12 = arith.constant 0 : index
    %c0_13 = arith.constant 0 : index
    %23 = vector.load %arg4[%c0_12, %c0_13] : memref<1x128xf32, #tpu.memory_space<vmem>>, vector<1x128xf32>
    %24 = vector.broadcast %23 : vector<1x128xf32> to vector<16x128xf32>
    %25 = arith.addf %22, %24 : vector<16x128xf32>
    %26 = math.tanh %25 : vector<16x128xf32>
    %27 = vector.shape_cast %26 : vector<16x128xf32> to vector<2x8x128xf32>
    %c0_14 = arith.constant 0 : index
    %c0_15 = arith.constant 0 : index
    %c0_16 = arith.constant 0 : index
    %28 = vector.load %arg5[%c0_14, %c0_15, %c0_16] : memref<2x8x128xf32, #tpu.memory_space<vmem>>, vector<2x8x128xf32>
    tpu.vector_store %arg5[%c0_14, %c0_15, %c0_16], %27 {strides = array<i32>} : memref<2x8x128xf32, #tpu.memory_space<vmem>>, vector<2x8x128xf32>,
    %c0_17 = arith.constant 0 : index
    %c0_18 = arith.constant 0 : index
    %c0_19 = arith.constant 0 : index
    %29 = vector.load %arg6[%c0_17, %c0_18, %c0_19] : memref<2x8x128xf32, #tpu.memory_space<vmem>>, vector<2x8x128xf32>
    tpu.vector_store %arg6[%c0_17, %c0_18, %c0_19], %17 {strides = array<i32>} : memref<2x8x128xf32, #tpu.memory_space<vmem>>, vector<2x8x128xf32>,
    return
  }
  func.func @transform_0(%arg0: i32) -> (i32, i32, i32) {
    %c0_i32 = arith.constant 0 : i32
    %c0_i32_0 = arith.constant 0 : i32
    %c0_i32_1 = arith.constant 0 : i32
    return %arg0, %c0_i32, %c0_i32_0 : i32, i32, i32
  }
  func.func @transform_1(%arg0: i32) -> (i32, i32, i32) {
    %c0_i32 = arith.constant 0 : i32
    %c0_i32_0 = arith.constant 0 : i32
    %c0_i32_1 = arith.constant 0 : i32
    return %arg0, %c0_i32, %c0_i32_0 : i32, i32, i32
  }
  func.func @transform_2(%arg0: i32) -> (i32, i32) {
    %c0_i32 = arith.constant 0 : i32
    %c0_i32_0 = arith.constant 0 : i32
    %c0_i32_1 = arith.constant 0 : i32
    return %c0_i32, %c0_i32_0 : i32, i32
  }
  func.func @transform_3(%arg0: i32) -> (i32, i32) {
    %c0_i32 = arith.constant 0 : i32
    %c0_i32_0 = arith.constant 0 : i32
    %c0_i32_1 = arith.constant 0 : i32
    return %c0_i32, %c0_i32_0 : i32, i32
  }
  func.func @transform_4(%arg0: i32) -> (i32, i32, i32) {
    %c0_i32 = arith.constant 0 : i32
    %c0_i32_0 = arith.constant 0 : i32
    %c0_i32_1 = arith.constant 0 : i32
    return %arg0, %c0_i32, %c0_i32_0 : i32, i32, i32
  }
  func.func @transform_5(%arg0: i32) -> (i32, i32, i32) {
    %c0_i32 = arith.constant 0 : i32
    %c0_i32_0 = arith.constant 0 : i32
    %c0_i32_1 = arith.constant 0 : i32
    return %arg0, %c0_i32, %c0_i32_0 : i32, i32, i32
  }
}

</mosaic_0001>

<llo_original>
// kernel: tpu_custom_call.1
$region0: #{tpu_custom_call.1}
  #allocation0 [shape = 'u32[]', space=smem, size = 0x4, offset = 0x4, fixed_abs, tag = 'smem constant byte address 0x4 - core index']
  #allocation1 [shape = 'u32[144,128]{1,0:T(1,128)}', space=vmem, size = 0x12000, scoped, tag = 'internal scratch']
  %s0 = inlined_call_operand.hbm [shape: f32[2,8,128], index: 0, kind: input, shape index: {}]
  %s1 = inlined_call_operand.hbm [shape: f32[2,128,128], index: 1, kind: input, shape index: {}]
  %s2 = inlined_call_operand.hbm [shape: f32[256,128], index: 2, kind: input, shape index: {}]
  %s3 = inlined_call_operand.vmem [shape: f32[1,128], index: 3, kind: input, shape index: {}]
  %s4 = inlined_call_operand.hbm [shape: f32[2,8,128], index: 4, kind: output, shape index: {0}]
  %s5 = inlined_call_operand.hbm [shape: f32[2,8,128], index: 5, kind: output, shape index: {1}]
  %6 = xla_tuple %s4, %s5
  %s7 = sld [smem:[#allocation0]]
  $region46: #{tpu_custom_call.1} parent=0
    _
  %s9 = ssub.s32 1, %s7
  %s10 = scalar_select 0, %s9, %s7
  $region1: #{tpu_custom_call.1} parent=0
    #allocation2 [shape = 'u8[8192]{0}', space=vmem, size = 0x2000, scoped, tag = 'input window, operand 0, single buffered']
    #allocation3 [shape = 's32[1]{0}', space=sflag, size = 0x4, scoped, tag = 'scoped memory for tpu_custom_call.1']
    #allocation4 [shape = 's32[1]{0}', space=sflag, size = 0x4, scoped, tag = 'scoped memory for tpu_custom_call.1']
    #allocation5 [shape = 'u8[131072]{0}', space=vmem, size = 0x20000, scoped, tag = 'input window, operand 1, single buffered']
    #allocation6 [shape = 's32[1]{0}', space=sflag, size = 0x4, scoped, tag = 'scoped memory for tpu_custom_call.1']
    #allocation7 [shape = 'u8[131072]{0}', space=vmem, size = 0x20000, scoped, tag = 'input window, operand 2, single buffered']
    #allocation8 [shape = 'u8[8192]{0}', space=vmem, size = 0x2000, scoped, tag = 'output window, operand 0, single buffered']
    #allocation9 [shape = 'u8[8192]{0}', space=vmem, size = 0x2000, scoped, tag = 'output window, operand 1, single buffered']
    #allocation10 [shape = 's32[1]{0}', space=sflag, size = 0x4, scoped, tag = 'scoped memory for tpu_custom_call.1']
    %11 = vsyncpa [#allocation3], 0
    %12 = vsyncpa [#allocation6], 0
    %13 = vsyncpa [#allocation4], 0
    %14 = vsyncpa [#allocation10], 0
    // Predicated region
    $region2: #{tpu_custom_call.1} parent=1 // pred_check
      _
    $region3: #{tpu_custom_call.1} parent=1 // pred_check_branch
      %16 = sbr.rel (0) target = $region5
    $region4: #{tpu_custom_call.1} parent=1 // pred_region
      %s18 = ssub.s32 256, 256
      %19 = vsyncadd [#allocation3], %s18
      %s20 = sshll.u32 [#allocation2], 4
      %s21 = int_to_ptr.vmem [resolvable:$true] %s20
      %26 = dma.hbm_to_vmem [thread:$0]  %s0, 256, %s21, [#allocation3], 128, 128, 8
    $region5: #{tpu_custom_call.1} parent=1 // pred_fallthru
      _
    // Predicated region
    $region6: #{tpu_custom_call.1} parent=1 // pred_check
      _
    $region7: #{tpu_custom_call.1} parent=1 // pred_check_branch
      %28 = sbr.rel (0) target = $region9
    $region8: #{tpu_custom_call.1} parent=1 // pred_region
      %s30 = ssub.s32 4096, 4096
      %31 = vsyncadd [#allocation6], %s30
      %s32 = sshll.u32 [#allocation5], 4
      %s33 = int_to_ptr.vmem [resolvable:$true] %s32
      %38 = dma.hbm_to_vmem [thread:$0]  %s1, 4096, %s33, [#allocation6], 128, 128, 8
    $region9: #{tpu_custom_call.1} parent=1 // pred_fallthru
      _
    // Predicated region
    $region10: #{tpu_custom_call.1} parent=1 // pred_check
      _
    $region11: #{tpu_custom_call.1} parent=1 // pred_check_branch
      %40 = sbr.rel (0) target = $region13
    $region12: #{tpu_custom_call.1} parent=1 // pred_region
      %s42 = ssub.s32 4096, 4096
      %43 = vsyncadd [#allocation6], %s42
      %s44 = sshll.u32 [#allocation7], 4
      %s45 = int_to_ptr.vmem [resolvable:$true] %s44
      %50 = dma.hbm_to_vmem [thread:$0]  %s2, 4096, %s45, [#allocation6], 128, 128, 8
    $region13: #{tpu_custom_call.1} parent=1 // pred_fallthru
      _
    // Predicated region
    $region14: #{tpu_custom_call.1} parent=1 // pred_check
      _
    $region15: #{tpu_custom_call.1} parent=1 // pred_check_branch
      %52 = sbr.rel (0) target = $region17
    $region16: #{tpu_custom_call.1} parent=1 // pred_region
      _
    $region17: #{tpu_custom_call.1} parent=1 // pred_fallthru
      _
    // Predicated region
    $region18: #{tpu_custom_call.1} parent=1 // pred_check
      _
    $region19: #{tpu_custom_call.1} parent=1 // pred_check_branch
      %54 = sbr.rel (0) target = $region21
    $region20: #{tpu_custom_call.1} parent=1 // pred_region
      %55 = dma.done [#allocation3], 256
    $region21: #{tpu_custom_call.1} parent=1 // pred_fallthru
      _
    // Predicated region
    $region22: #{tpu_custom_call.1} parent=1 // pred_check
      _
    $region23: #{tpu_custom_call.1} parent=1 // pred_check_branch
      %57 = sbr.rel (0) target = $region25
    $region24: #{tpu_custom_call.1} parent=1 // pred_region
      %58 = dma.done [#allocation6], 4096
    $region25: #{tpu_custom_call.1} parent=1 // pred_fallthru
      _
    // Predicated region
    $region26: #{tpu_custom_call.1} parent=1 // pred_check
      _
    $region27: #{tpu_custom_call.1} parent=1 // pred_check_branch
      %60 = sbr.rel (0) target = $region29
    $region28: #{tpu_custom_call.1} parent=1 // pred_region
      %61 = dma.done [#allocation6], 4096
    $region29: #{tpu_custom_call.1} parent=1 // pred_fallthru
      _
    %v62 = vld [vmem:[#allocation2] sm:$0xff]
    %v63 = vld [vmem:[#allocation2 + $0x8] sm:$0xff]
    %v64 = vld [vmem:[#allocation5] sm:$0xff]
    %v65 = vld [vmem:[#allocation5 + $0x8] sm:$0xff]
    %v66 = vld [vmem:[#allocation5 + $0x10] sm:$0xff]
    %v67 = vld [vmem:[#allocation5 + $0x18] sm:$0xff]
    %v68 = vld [vmem:[#allocation5 + $0x20] sm:$0xff]
    %v69 = vld [vmem:[#allocation5 + $0x28] sm:$0xff]
    %v70 = vld [vmem:[#allocation5 + $0x30] sm:$0xff]
    %v71 = vld [vmem:[#allocation5 + $0x38] sm:$0xff]
    %v72 = vld [vmem:[#allocation5 + $0x40] sm:$0xff]
    %v73 = vld [vmem:[#allocation5 + $0x48] sm:$0xff]
    %v74 = vld [vmem:[#allocation5 + $0x50] sm:$0xff]
    %v75 = vld [vmem:[#allocation5 + $0x58] sm:$0xff]
    %v76 = vld [vmem:[#allocation5 + $0x60] sm:$0xff]
    %v77 = vld [vmem:[#allocation5 + $0x68] sm:$0xff]
    %v78 = vld [vmem:[#allocation5 + $0x70] sm:$0xff]
    %v79 = vld [vmem:[#allocation5 + $0x78] sm:$0xff]
    %v80 = vld [vmem:[#allocation5 + $0x80] sm:$0xff]
    %v81 = vld [vmem:[#allocation5 + $0x88] sm:$0xff]
    %v82 = vld [vmem:[#allocation5 + $0x90] sm:$0xff]
    %v83 = vld [vmem:[#allocation5 + $0x98] sm:$0xff]
    %v84 = vld [vmem:[#allocation5 + $0xa0] sm:$0xff]
    %v85 = vld [vmem:[#allocation5 + $0xa8] sm:$0xff]
    %v86 = vld [vmem:[#allocation5 + $0xb0] sm:$0xff]
    %v87 = vld [vmem:[#allocation5 + $0xb8] sm:$0xff]
    %v88 = vld [vmem:[#allocation5 + $0xc0] sm:$0xff]
    %v89 = vld [vmem:[#allocation5 + $0xc8] sm:$0xff]
    %v90 = vld [vmem:[#allocation5 + $0xd0] sm:$0xff]
    %v91 = vld [vmem:[#allocation5 + $0xd8] sm:$0xff]
    %v92 = vld [vmem:[#allocation5 + $0xe0] sm:$0xff]
    %v93 = vld [vmem:[#allocation5 + $0xe8] sm:$0xff]
    %v94 = vld [vmem:[#allocation5 + $0xf0] sm:$0xff]
    %v95 = vld [vmem:[#allocation5 + $0xf8] sm:$0xff]
    %96 = vmatprep.subr.mxu0 0.0
    %97 = vmatpush1.xpose.msra.mxu0 %v79
    %98 = vmatprep.subr.mxu0 0.0
    %99 = vmatpush1.xpose.msra.mxu0 %v78
    %100 = vmatprep.subr.mxu0 0.0
    %101 = vmatpush1.xpose.msra.mxu0 %v77
    %102 = vmatprep.subr.mxu0 0.0
    %103 = vmatpush1.xpose.msra.mxu0 %v76
    %104 = vmatprep.subr.mxu0 0.0
    %105 = vmatpush1.xpose.msra.mxu0 %v75
    %106 = vmatprep.subr.mxu0 0.0
    %107 = vmatpush1.xpose.msra.mxu0 %v74
    %108 = vmatprep.subr.mxu0 0.0
    %109 = vmatpush1.xpose.msra.mxu0 %v73
    %110 = vmatprep.subr.mxu0 0.0
    %111 = vmatpush1.xpose.msra.mxu0 %v72
    %112 = vmatprep.subr.mxu0 0.0
    %113 = vmatpush1.xpose.msra.mxu0 %v71
    %114 = vmatprep.subr.mxu0 0.0
    %115 = vmatpush1.xpose.msra.mxu0 %v70
    %116 = vmatprep.subr.mxu0 0.0
    %117 = vmatpush1.xpose.msra.mxu0 %v69
    %118 = vmatprep.subr.mxu0 0.0
    %119 = vmatpush1.xpose.msra.mxu0 %v68
    %120 = vmatprep.subr.mxu0 0.0
    %121 = vmatpush1.xpose.msra.mxu0 %v67
    %122 = vmatprep.subr.mxu0 0.0
    %123 = vmatpush1.xpose.msra.mxu0 %v66
    %124 = vmatprep.subr.mxu0 0.0
    %125 = vmatpush1.xpose.msra.mxu0 %v65
    %126 = vmatprep.subr.mxu0 0.0
    %127 = vmatpush1.xpose.msra.mxu0 %v64
    %128 = vmatprep.subr.mxu0 0.0
    %129 = vmatpush2.xpose.msra.mxu0 0.0
    %130 = vmatprep.subr.mxu0 0.0
    %131 = vmatpush2.xpose.msra.mxu0 0.0
    %132 = vmatprep.subr.mxu0 0.0
    %133 = vmatpush2.xpose.msra.mxu0 0.0
    %134 = vmatprep.subr.mxu0 0.0
    %135 = vmatpush2.xpose.msra.mxu0 0.0
    %136 = vmatprep.subr.mxu0 0.0
    %137 = vmatpush2.xpose.msra.mxu0 0.0
    %138 = vmatprep.subr.mxu0 0.0
    %139 = vmatpush2.xpose.msra.mxu0 0.0
    %140 = vmatprep.subr.mxu0 0.0
    %141 = vmatpush2.xpose.msra.mxu0 0.0
    %142 = vmatprep.subr.mxu0 0.0
    %143 = vmatpush2.xpose.msra.mxu0 0.0
    %144 = vmatprep.subr.mxu0 0.0
    %145 = vmatpush2.xpose.msra.mxu0 0.0
    %146 = vmatprep.subr.mxu0 0.0
    %147 = vmatpush2.xpose.msra.mxu0 0.0
    %148 = vmatprep.subr.mxu0 0.0
    %149 = vmatpush2.xpose.msra.mxu0 0.0
    %150 = vmatprep.subr.mxu0 0.0
    %151 = vmatpush2.xpose.msra.mxu0 0.0
    %152 = vmatprep.subr.mxu0 0.0
    %153 = vmatpush2.xpose.msra.mxu0 0.0
    %154 = vmatprep.subr.mxu0 0.0
    %155 = vmatpush2.xpose.msra.mxu0 0.0
    %156 = vmatprep.subr.mxu0 0.0
    %157 = vmatpush2.xpose.msra.mxu0 0.0
    %158 = vmatprep.subr.mxu0 0.0
    %159 = vmatpush2.xpose.msra.mxu0 0.0
    %160 = vmatprep.mubr.f32.mxu0 0.0
    %161 = vmatmul.mubr.f32.gmra.mxu0 %v62
    %v162 = vpop.f32.mrf.mxu0
    %v163 = vadd.f32 0.0, %v162
    %v164 = vpop.f32.mrf.mxu0
    %165 = vdwg.mxu0
    %166 = vmatprep.subr.mxu0 0.0
    %167 = vmatpush1.xpose.msra.mxu0 %v95
    %168 = vmatprep.subr.mxu0 0.0
    %169 = vmatpush1.xpose.msra.mxu0 %v94
    %170 = vmatprep.subr.mxu0 0.0
    %171 = vmatpush1.xpose.msra.mxu0 %v93
    %172 = vmatprep.subr.mxu0 0.0
    %173 = vmatpush1.xpose.msra.mxu0 %v92
    %174 = vmatprep.subr.mxu0 0.0
    %175 = vmatpush1.xpose.msra.mxu0 %v91
    %176 = vmatprep.subr.mxu0 0.0
    %177 = vmatpush1.xpose.msra.mxu0 %v90
    %178 = vmatprep.subr.mxu0 0.0
    %179 = vmatpush1.xpose.msra.mxu0 %v89
    %180 = vmatprep.subr.mxu0 0.0
    %181 = vmatpush1.xpose.msra.mxu0 %v88
    %182 = vmatprep.subr.mxu0 0.0
    %183 = vmatpush1.xpose.msra.mxu0 %v87
    %184 = vmatprep.subr.mxu0 0.0
    %185 = vmatpush1.xpose.msra.mxu0 %v86
    %186 = vmatprep.subr.mxu0 0.0
    %187 = vmatpush1.xpose.msra.mxu0 %v85
    %188 = vmatprep.subr.mxu0 0.0
    %189 = vmatpush1.xpose.msra.mxu0 %v84
    %190 = vmatprep.subr.mxu0 0.0
    %191 = vmatpush1.xpose.msra.mxu0 %v83
    %192 = vmatprep.subr.mxu0 0.0
    %193 = vmatpush1.xpose.msra.mxu0 %v82
    %194 = vmatprep.subr.mxu0 0.0
    %195 = vmatpush1.xpose.msra.mxu0 %v81
    %196 = vmatprep.subr.mxu0 0.0
    %197 = vmatpush1.xpose.msra.mxu0 %v80
    %198 = vmatprep.subr.mxu0 0.0
    %199 = vmatpush2.xpose.msra.mxu0 0.0
    %200 = vmatprep.subr.mxu0 0.0
    %201 = vmatpush2.xpose.msra.mxu0 0.0
    %202 = vmatprep.subr.mxu0 0.0
    %203 = vmatpush2.xpose.msra.mxu0 0.0
    %204 = vmatprep.subr.mxu0 0.0
    %205 = vmatpush2.xpose.msra.mxu0 0.0
    %206 = vmatprep.subr.mxu0 0.0
    %207 = vmatpush2.xpose.msra.mxu0 0.0
    %208 = vmatprep.subr.mxu0 0.0
    %209 = vmatpush2.xpose.msra.mxu0 0.0
    %210 = vmatprep.subr.mxu0 0.0
    %211 = vmatpush2.xpose.msra.mxu0 0.0
    %212 = vmatprep.subr.mxu0 0.0
    %213 = vmatpush2.xpose.msra.mxu0 0.0
    %214 = vmatprep.subr.mxu0 0.0
    %215 = vmatpush2.xpose.msra.mxu0 0.0
    %216 = vmatprep.subr.mxu0 0.0
    %217 = vmatpush2.xpose.msra.mxu0 0.0
    %218 = vmatprep.subr.mxu0 0.0
    %219 = vmatpush2.xpose.msra.mxu0 0.0
    %220 = vmatprep.subr.mxu0 0.0
    %221 = vmatpush2.xpose.msra.mxu0 0.0
    %222 = vmatprep.subr.mxu0 0.0
    %223 = vmatpush2.xpose.msra.mxu0 0.0
    %224 = vmatprep.subr.mxu0 0.0
    %225 = vmatpush2.xpose.msra.mxu0 0.0
    %226 = vmatprep.subr.mxu0 0.0
    %227 = vmatpush2.xpose.msra.mxu0 0.0
    %228 = vmatprep.subr.mxu0 0.0
    %229 = vmatpush2.xpose.msra.mxu0 0.0
    %230 = vmatprep.mubr.f32.mxu0 0.0
    %231 = vmatmul.mubr.f32.gmra.mxu0 %v63
    %v232 = vpop.f32.mrf.mxu0
    %v233 = vadd.f32 0.0, %v232
    %v234 = vpop.f32.mrf.mxu0
    %235 = vdwg.mxu0
    %v236 = vlaneseq
    %v237 = vand.u32 %v236, 127
    %vm238 = vcmp.lt.s32.totalorder %v237, 16
    %v239 = vsel %vm238, %v163, -inf
    %v240 = vsel %vm238, %v233, -inf
    %241 = vmax.xlane.f32.xlu0 %v239
    %v242 = vpop.xlane.xlu0 %241
    %243 = vmax.xlane.f32.xlu0 %v240
    %v244 = vpop.xlane.xlu0 %243
    %v245 = vsub.f32 %v239, %v242
    %v246 = vsub.f32 %v240, %v244
    %v247 = vmul.f32 %v245, 1.442695
    %v248 = vpow.pop %v247
    %v249 = vmul.f32 %v246, 1.442695
    %v250 = vpow.pop %v249
    %251 = vadd.xlane.f32.xlu0 %v248
    %v252 = vpop.xlane.xlu0 %251
    %253 = vadd.xlane.f32.xlu0 %v250
    %v254 = vpop.xlane.xlu0 %253
    %v255 = vrcp.pop %v252
    %v256 = vrcp.pop %v254
    %v257 = vmul.f32 %v248, %v255
    %v258 = vmul.f32 %v250, %v256
    %259 = vmatprep.subr.mxu0 0.0
    %260 = vmatpush1.msra.mxu0 %v79
    %261 = vmatprep.subr.mxu0 0.0
    %262 = vmatpush1.msra.mxu0 %v78
    %263 = vmatprep.subr.mxu0 0.0
    %264 = vmatpush1.msra.mxu0 %v77
    %265 = vmatprep.subr.mxu0 0.0
    %266 = vmatpush1.msra.mxu0 %v76
    %267 = vmatprep.subr.mxu0 0.0
    %268 = vmatpush1.msra.mxu0 %v75
    %269 = vmatprep.subr.mxu0 0.0
    %270 = vmatpush1.msra.mxu0 %v74
    %271 = vmatprep.subr.mxu0 0.0
    %272 = vmatpush1.msra.mxu0 %v73
    %273 = vmatprep.subr.mxu0 0.0
    %274 = vmatpush1.msra.mxu0 %v72
    %275 = vmatprep.subr.mxu0 0.0
    %276 = vmatpush1.msra.mxu0 %v71
    %277 = vmatprep.subr.mxu0 0.0
    %278 = vmatpush1.msra.mxu0 %v70
    %279 = vmatprep.subr.mxu0 0.0
    %280 = vmatpush1.msra.mxu0 %v69
    %281 = vmatprep.subr.mxu0 0.0
    %282 = vmatpush1.msra.mxu0 %v68
    %283 = vmatprep.subr.mxu0 0.0
    %284 = vmatpush1.msra.mxu0 %v67
    %285 = vmatprep.subr.mxu0 0.0
    %286 = vmatpush1.msra.mxu0 %v66
    %287 = vmatprep.subr.mxu0 0.0
    %288 = vmatpush1.msra.mxu0 %v65
    %289 = vmatprep.subr.mxu0 0.0
    %290 = vmatpush1.msra.mxu0 %v64
    %291 = vmatprep.subr.mxu0 0.0
    %292 = vmatpush2.msra.mxu0 0.0
    %293 = vmatprep.subr.mxu0 0.0
    %294 = vmatpush2.msra.mxu0 0.0
    %295 = vmatprep.subr.mxu0 0.0
    %296 = vmatpush2.msra.mxu0 0.0
    %297 = vmatprep.subr.mxu0 0.0
    %298 = vmatpush2.msra.mxu0 0.0
    %299 = vmatprep.subr.mxu0 0.0
    %300 = vmatpush2.msra.mxu0 0.0
    %301 = vmatprep.subr.mxu0 0.0
    %302 = vmatpush2.msra.mxu0 0.0
    %303 = vmatprep.subr.mxu0 0.0
    %304 = vmatpush2.msra.mxu0 0.0
    %305 = vmatprep.subr.mxu0 0.0
    %306 = vmatpush2.msra.mxu0 0.0
    %307 = vmatprep.subr.mxu0 0.0
    %308 = vmatpush2.msra.mxu0 0.0
    %309 = vmatprep.subr.mxu0 0.0
    %310 = vmatpush2.msra.mxu0 0.0
    %311 = vmatprep.subr.mxu0 0.0
    %312 = vmatpush2.msra.mxu0 0.0
    %313 = vmatprep.subr.mxu0 0.0
    %314 = vmatpush2.msra.mxu0 0.0
    %315 = vmatprep.subr.mxu0 0.0
    %316 = vmatpush2.msra.mxu0 0.0
    %317 = vmatprep.subr.mxu0 0.0
    %318 = vmatpush2.msra.mxu0 0.0
    %319 = vmatprep.subr.mxu0 0.0
    %320 = vmatpush2.msra.mxu0 0.0
    %321 = vmatprep.subr.mxu0 0.0
    %322 = vmatpush2.msra.mxu0 0.0
    %323 = vmatprep.mubr.f32.mxu0 0.0
    %324 = vmatmul.mubr.f32.gmra.mxu0 %v257
    %v325 = vpop.f32.mrf.mxu0
    %v326 = vadd.f32 0.0, %v325
    %v327 = vpop.f32.mrf.mxu0
    %328 = vdwg.mxu0
    %329 = vmatprep.subr.mxu0 0.0
    %330 = vmatpush1.msra.mxu0 %v95
    %331 = vmatprep.subr.mxu0 0.0
    %332 = vmatpush1.msra.mxu0 %v94
    %333 = vmatprep.subr.mxu0 0.0
    %334 = vmatpush1.msra.mxu0 %v93
    %335 = vmatprep.subr.mxu0 0.0
    %336 = vmatpush1.msra.mxu0 %v92
    %337 = vmatprep.subr.mxu0 0.0
    %338 = vmatpush1.msra.mxu0 %v91
    %339 = vmatprep.subr.mxu0 0.0
    %340 = vmatpush1.msra.mxu0 %v90
    %341 = vmatprep.subr.mxu0 0.0
    %342 = vmatpush1.msra.mxu0 %v89
    %343 = vmatprep.subr.mxu0 0.0
    %344 = vmatpush1.msra.mxu0 %v88
    %345 = vmatprep.subr.mxu0 0.0
    %346 = vmatpush1.msra.mxu0 %v87
    %347 = vmatprep.subr.mxu0 0.0
    %348 = vmatpush1.msra.mxu0 %v86
    %349 = vmatprep.subr.mxu0 0.0
    %350 = vmatpush1.msra.mxu0 %v85
    %351 = vmatprep.subr.mxu0 0.0
    %352 = vmatpush1.msra.mxu0 %v84
    %353 = vmatprep.subr.mxu0 0.0
    %354 = vmatpush1.msra.mxu0 %v83
    %355 = vmatprep.subr.mxu0 0.0
    %356 = vmatpush1.msra.mxu0 %v82
    %357 = vmatprep.subr.mxu0 0.0
    %358 = vmatpush1.msra.mxu0 %v81
    %359 = vmatprep.subr.mxu0 0.0
    %360 = vmatpush1.msra.mxu0 %v80
    %361 = vmatprep.subr.mxu0 0.0
    %362 = vmatpush2.msra.mxu0 0.0
    %363 = vmatprep.subr.mxu0 0.0
    %364 = vmatpush2.msra.mxu0 0.0
    %365 = vmatprep.subr.mxu0 0.0
    %366 = vmatpush2.msra.mxu0 0.0
    %367 = vmatprep.subr.mxu0 0.0
    %368 = vmatpush2.msra.mxu0 0.0
    %369 = vmatprep.subr.mxu0 0.0
    %370 = vmatpush2.msra.mxu0 0.0
    %371 = vmatprep.subr.mxu0 0.0
    %372 = vmatpush2.msra.mxu0 0.0
    %373 = vmatprep.subr.mxu0 0.0
    %374 = vmatpush2.msra.mxu0 0.0
    %375 = vmatprep.subr.mxu0 0.0
    %376 = vmatpush2.msra.mxu0 0.0
    %377 = vmatprep.subr.mxu0 0.0
    %378 = vmatpush2.msra.mxu0 0.0
    %379 = vmatprep.subr.mxu0 0.0
    %380 = vmatpush2.msra.mxu0 0.0
    %381 = vmatprep.subr.mxu0 0.0
    %382 = vmatpush2.msra.mxu0 0.0
    %383 = vmatprep.subr.mxu0 0.0
    %384 = vmatpush2.msra.mxu0 0.0
    %385 = vmatprep.subr.mxu0 0.0
    %386 = vmatpush2.msra.mxu0 0.0
    %387 = vmatprep.subr.mxu0 0.0
    %388 = vmatpush2.msra.mxu0 0.0
    %389 = vmatprep.subr.mxu0 0.0
    %390 = vmatpush2.msra.mxu0 0.0
    %391 = vmatprep.subr.mxu0 0.0
    %392 = vmatpush2.msra.mxu0 0.0
    %393 = vmatprep.mubr.f32.mxu0 0.0
    %394 = vmatmul.mubr.f32.gmra.mxu0 %v258
    %v395 = vpop.f32.mrf.mxu0
    %v396 = vadd.f32 0.0, %v395
    %v397 = vpop.f32.mrf.mxu0
    %398 = vdwg.mxu0
    %v399 = vld [vmem:[#allocation7] sm:$0xff]
    %v400 = vld [vmem:[#allocation7 + $0x8] sm:$0xff]
    %v401 = vld [vmem:[#allocation7 + $0x10] sm:$0xff]
    %v402 = vld [vmem:[#allocation7 + $0x18] sm:$0xff]
    %v403 = vld [vmem:[#allocation7 + $0x20] sm:$0xff]
    %v404 = vld [vmem:[#allocation7 + $0x28] sm:$0xff]
    %v405 = vld [vmem:[#allocation7 + $0x30] sm:$0xff]
    %v406 = vld [vmem:[#allocation7 + $0x38] sm:$0xff]
    %v407 = vld [vmem:[#allocation7 + $0x40] sm:$0xff]
    %v408 = vld [vmem:[#allocation7 + $0x48] sm:$0xff]
    %v409 = vld [vmem:[#allocation7 + $0x50] sm:$0xff]
    %v410 = vld [vmem:[#allocation7 + $0x58] sm:$0xff]
    %v411 = vld [vmem:[#allocation7 + $0x60] sm:$0xff]
    %v412 = vld [vmem:[#allocation7 + $0x68] sm:$0xff]
    %v413 = vld [vmem:[#allocation7 + $0x70] sm:$0xff]
    %v414 = vld [vmem:[#allocation7 + $0x78] sm:$0xff]
    %v415 = vld [vmem:[#allocation7 + $0x80] sm:$0xff]
    %v416 = vld [vmem:[#allocation7 + $0x88] sm:$0xff]
    %v417 = vld [vmem:[#allocation7 + $0x90] sm:$0xff]
    %v418 = vld [vmem:[#allocation7 + $0x98] sm:$0xff]
    %v419 = vld [vmem:[#allocation7 + $0xa0] sm:$0xff]
    %v420 = vld [vmem:[#allocation7 + $0xa8] sm:$0xff]
    %v421 = vld [vmem:[#allocation7 + $0xb0] sm:$0xff]
    %v422 = vld [vmem:[#allocation7 + $0xb8] sm:$0xff]
    %v423 = vld [vmem:[#allocation7 + $0xc0] sm:$0xff]
    %v424 = vld [vmem:[#allocation7 + $0xc8] sm:$0xff]
    %v425 = vld [vmem:[#allocation7 + $0xd0] sm:$0xff]
    %v426 = vld [vmem:[#allocation7 + $0xd8] sm:$0xff]
    %v427 = vld [vmem:[#allocation7 + $0xe0] sm:$0xff]
    %v428 = vld [vmem:[#allocation7 + $0xe8] sm:$0xff]
    %v429 = vld [vmem:[#allocation7 + $0xf0] sm:$0xff]
    %v430 = vld [vmem:[#allocation7 + $0xf8] sm:$0xff]
    %v431 = vld [vmem:[%s3] sm:$0x1]
    %v433 = vlaneseq
    %v434 = vshrl.u32 %v433, 7
    %v435 = vsub.s32 0, %v434
    %v436 = vrot.slane %v431, %v435
    %438 = vmatprep.subr.mxu0 0.0
    %439 = vmatpush1.msra.mxu0 %v414
    %440 = vmatprep.subr.mxu0 0.0
    %441 = vmatpush1.msra.mxu0 %v413
    %442 = vmatprep.subr.mxu0 0.0
    %443 = vmatpush1.msra.mxu0 %v412
    %444 = vmatprep.subr.mxu0 0.0
    %445 = vmatpush1.msra.mxu0 %v411
    %446 = vmatprep.subr.mxu0 0.0
    %447 = vmatpush1.msra.mxu0 %v410
    %448 = vmatprep.subr.mxu0 0.0
    %449 = vmatpush1.msra.mxu0 %v409
    %450 = vmatprep.subr.mxu0 0.0
    %451 = vmatpush1.msra.mxu0 %v408
    %452 = vmatprep.subr.mxu0 0.0
    %453 = vmatpush1.msra.mxu0 %v407
    %454 = vmatprep.subr.mxu0 0.0
    %455 = vmatpush1.msra.mxu0 %v406
    %456 = vmatprep.subr.mxu0 0.0
    %457 = vmatpush1.msra.mxu0 %v405
    %458 = vmatprep.subr.mxu0 0.0
    %459 = vmatpush1.msra.mxu0 %v404
    %460 = vmatprep.subr.mxu0 0.0
    %461 = vmatpush1.msra.mxu0 %v403
    %462 = vmatprep.subr.mxu0 0.0
    %463 = vmatpush1.msra.mxu0 %v402
    %464 = vmatprep.subr.mxu0 0.0
    %465 = vmatpush1.msra.mxu0 %v401
    %466 = vmatprep.subr.mxu0 0.0
    %467 = vmatpush1.msra.mxu0 %v400
    %468 = vmatprep.subr.mxu0 0.0
    %469 = vmatpush1.msra.mxu0 %v399
    %470 = vmatprep.subr.mxu0 0.0
    %471 = vmatpush2.msra.mxu0 %v430
    %472 = vmatprep.subr.mxu0 0.0
    %473 = vmatpush2.msra.mxu0 %v429
    %474 = vmatprep.subr.mxu0 0.0
    %475 = vmatpush2.msra.mxu0 %v428
    %476 = vmatprep.subr.mxu0 0.0
    %477 = vmatpush2.msra.mxu0 %v427
    %478 = vmatprep.subr.mxu0 0.0
    %479 = vmatpush2.msra.mxu0 %v426
    %480 = vmatprep.subr.mxu0 0.0
    %481 = vmatpush2.msra.mxu0 %v425
    %482 = vmatprep.subr.mxu0 0.0
    %483 = vmatpush2.msra.mxu0 %v424
    %484 = vmatprep.subr.mxu0 0.0
    %485 = vmatpush2.msra.mxu0 %v423
    %486 = vmatprep.subr.mxu0 0.0
    %487 = vmatpush2.msra.mxu0 %v422
    %488 = vmatprep.subr.mxu0 0.0
    %489 = vmatpush2.msra.mxu0 %v421
    %490 = vmatprep.subr.mxu0 0.0
    %491 = vmatpush2.msra.mxu0 %v420
    %492 = vmatprep.subr.mxu0 0.0
    %493 = vmatpush2.msra.mxu0 %v419
    %494 = vmatprep.subr.mxu0 0.0
    %495 = vmatpush2.msra.mxu0 %v418
    %496 = vmatprep.subr.mxu0 0.0
    %497 = vmatpush2.msra.mxu0 %v417
    %498 = vmatprep.subr.mxu0 0.0
    %499 = vmatpush2.msra.mxu0 %v416
    %500 = vmatprep.subr.mxu0 0.0
    %501 = vmatpush2.msra.mxu0 %v415
    %502 = vmatprep.mubr.f32.mxu0 %v62
    %503 = vmatmul.mubr.f32.gmra.mxu0 %v326
    %v504 = vpop.f32.mrf.mxu0
    %v505 = vadd.f32 %v436, %v504
    %v506 = vpop.f32.mrf.mxu0
    %507 = vmatprep.mubr.f32.mxu0 %v63
    %508 = vmatmul.mubr.f32.gmra.mxu0 %v396
    %v509 = vpop.f32.mrf.mxu0
    %v510 = vadd.f32 %v436, %v509
    %v511 = vpop.f32.mrf.mxu0
    %512 = vdwg.mxu0
    %v513 = vtanh.pop %v505
    %v514 = vtanh.pop %v510
    %515 = vst [vmem:[#allocation8] sm:$0xff] %v513
    %516 = vst [vmem:[#allocation8 + $0x8] sm:$0xff] %v514
    %517 = vst [vmem:[#allocation9] sm:$0xff] %v257
    %518 = vst [vmem:[#allocation9 + $0x8] sm:$0xff] %v258
    // Predicated region
    $region30: #{tpu_custom_call.1} parent=1 // pred_check
      _
    $region31: #{tpu_custom_call.1} parent=1 // pred_check_branch
      %520 = sbr.rel (0) target = $region33
    $region32: #{tpu_custom_call.1} parent=1 // pred_region
      %s522 = ssub.s32 256, 256
      %523 = vsyncadd [#allocation4], %s522
      %s524 = sshll.u32 [#allocation8], 4
      %s525 = int_to_ptr.vmem [resolvable:$true] %s524
      %530 = dma.vmem_to_hbm [thread:$0]  %s525, 256, %s4, [#allocation4], 128, 128, 8
    $region33: #{tpu_custom_call.1} parent=1 // pred_fallthru
      _
    // Predicated region
    $region34: #{tpu_custom_call.1} parent=1 // pred_check
      _
    $region35: #{tpu_custom_call.1} parent=1 // pred_check_branch
      %532 = sbr.rel (0) target = $region37
    $region36: #{tpu_custom_call.1} parent=1 // pred_region
      %s534 = ssub.s32 256, 256
      %535 = vsyncadd [#allocation10], %s534
      %s536 = sshll.u32 [#allocation9], 4
      %s537 = int_to_ptr.vmem [resolvable:$true] %s536
      %542 = dma.vmem_to_hbm [thread:$0]  %s537, 256, %s5, [#allocation10], 128, 128, 8
    $region37: #{tpu_custom_call.1} parent=1 // pred_fallthru
      _
    // Predicated region
    $region38: #{tpu_custom_call.1} parent=1 // pred_check
      _
    $region39: #{tpu_custom_call.1} parent=1 // pred_check_branch
      %544 = sbr.rel (0) target = $region41
    $region40: #{tpu_custom_call.1} parent=1 // pred_region
      %545 = dma.done [#allocation4], 256
    $region41: #{tpu_custom_call.1} parent=1 // pred_fallthru
      _
    // Predicated region
    $region42: #{tpu_custom_call.1} parent=1 // pred_check
      _
    $region43: #{tpu_custom_call.1} parent=1 // pred_check_branch
      %547 = sbr.rel (0) target = $region45
    $region44: #{tpu_custom_call.1} parent=1 // pred_region
      %548 = dma.done [#allocation10], 256
    $region45: #{tpu_custom_call.1} parent=1 // pred_fallthru
      _
    %549 = vsyncpa [#allocation3], 1
    %550 = vsyncpa [#allocation6], 1
    %551 = vsyncpa [#allocation4], 1
    %552 = vsyncpa [#allocation10], 1

</llo_original>
